<compile_context>
chip_gen: v6e
topology: v6e:2x2x1
jax: 0.10.0
libtpu: 0.0.40
codegen_flags: <defaults>
</compile_context>

<pallas_src>
import functools
import math

import jax
import jax.numpy as jnp
from jax.experimental import pallas as pl
from jax.experimental.pallas import tpu as pltpu


def _round_up(x, m):
    return ((x + m - 1) // m) * m


def _cdiv(a, b):
    return (a + b - 1) // b


def _value_net_kernel(x_ref, w1_ref, w_ref, b_ref, o_ref, *, out_dim):
    """Fused 4-layer MLP on one (TB, S_pad) batch tile.

    x_ref : (TB, S_pad) f32   state tile (lanes padded only to sublane multiple)
    w1_ref: (S_pad, P)        layer-1 weight (f32 or bf16)
    w_ref : (3, P, P)         layers 2-4 weights (f32 or bf16)
    b_ref : (4, 1, P) f32     biases
    o_ref : (TB, out_dim) f32 real output columns only
    """
    h = x_ref[...]                                            # (TB, S_pad) f32
    # Layer 1: contraction over the real (sublane-rounded) state width.
    h = jnp.dot(h.astype(w1_ref.dtype), w1_ref[...],
                preferred_element_type=jnp.float32) + b_ref[0]
    h = jnp.maximum(h, 0.0)
    # Layers 2-4 at the padded hidden width P; f32 accumulation throughout.
    for layer in range(3):
        h = jnp.dot(h.astype(w_ref.dtype), w_ref[layer],
                    preferred_element_type=jnp.float32) + b_ref[layer + 1]
        if layer < 2:
            h = jnp.maximum(h, 0.0)                           # ReLU on the VPU
    o_ref[...] = h[:, :out_dim].astype(o_ref.dtype)           # only real columns


def init_params(key, state_dim, hidden_dim, output_dim=1):
    """Matches PyTorch init:
       - weights: xavier_uniform_  (bound = sqrt(6/(fan_in+fan_out)))
       - biases : nn.Linear default uniform(-1/sqrt(fan_in), 1/sqrt(fan_in))
       Weights stored as (in, out) so forward is x @ W + b (== x @ W_pt.T + b)."""
    dims = [(state_dim, hidden_dim),
            (hidden_dim, hidden_dim),
            (hidden_dim, hidden_dim),
            (hidden_dim, output_dim)]
    params = {}
    keys = jax.random.split(key, 2 * len(dims))
    for i, (fan_in, fan_out) in enumerate(dims):
        wk, bk = keys[2 * i], keys[2 * i + 1]
        w_bound = math.sqrt(6.0 / (fan_in + fan_out))
        b_bound = 1.0 / math.sqrt(fan_in)
        params[f"w{i+1}"] = jax.random.uniform(
            wk, (fan_in, fan_out), jnp.float32, -w_bound, w_bound)
        params[f"b{i+1}"] = jax.random.uniform(
            bk, (1, fan_out), jnp.float32, -b_bound, b_bound)
    return params


def pack_params(params, mxu_dtype=jnp.bfloat16):
    """Pack weights for the kernel.

    - w1 kept separate at shape (S_pad, P) with S_pad = round_up(state_dim, 8)
      so layer 1 contracts over the real state width.
    - layers 2-4 packed as one (3, P, P) tensor; biases as one (4, 1, P) f32.
    - P = round_up(max(hidden_dim, output_dim), 128) (lane-dense MXU tiles).
    Use mxu_dtype=jnp.float32 for bit-exact PyTorch-parity numerics."""
    state_dim = params["w1"].shape[0]
    hidden_dim = params["w1"].shape[1]
    output_dim = params["w4"].shape[1]
    P = _round_up(max(hidden_dim, output_dim), 128)
    S_pad = _round_up(state_dim, 8)

    w1 = jnp.zeros((S_pad, P), mxu_dtype)
    w1 = w1.at[:state_dim, :hidden_dim].set(params["w1"].astype(mxu_dtype))

    w = jnp.zeros((3, P, P), mxu_dtype)
    for i in range(3):
        wi = params[f"w{i+2}"]
        w = w.at[i, :wi.shape[0], :wi.shape[1]].set(wi.astype(mxu_dtype))

    b = jnp.zeros((4, 1, P), jnp.float32)
    for i in range(4):
        bi = params[f"b{i+1}"]
        b = b.at[i, 0, :bi.shape[1]].set(bi[0])

    return {"w1": w1, "w": w, "b": b,
            "state_dim": state_dim, "s_pad": S_pad,
            "out_dim": output_dim, "pad_dim": P}


def value_network_forward(state, packed, *, block_batch=2048):
    """state: [B, state_dim] -> [B, output_dim] float32."""
    B, S = state.shape
    assert S == packed["state_dim"]
    w1, w, b = packed["w1"], packed["w"], packed["b"]
    P = packed["pad_dim"]
    S_pad = packed["s_pad"]
    out_dim = packed["out_dim"]

    # Balanced batch tiling: enough tiles to stay under block_batch rows each,
    # and at least 2 tiles (when B permits) so v7x megacore gets both TCs busy.
    num_tiles = _cdiv(B, block_batch)
    if B >= 16 and num_tiles < 2:
        num_tiles = 2
    TB = _round_up(_cdiv(B, num_tiles), 8)
    B_pad = TB * num_tiles

    # Pad rows to B_pad and lanes only to S_pad (sublane multiple); padding is
    # mathematically inert for the rows we slice back out.
    x = jnp.zeros((B_pad, S_pad), jnp.float32)
    x = x.at[:B, :S].set(state.astype(jnp.float32))

    flops = int(2 * B_pad * (S_pad * P + 3 * P * P) + 8 * B_pad * P)
    bytes_accessed = int(x.size * 4                       # trimmed input
                         + B_pad * out_dim * 4            # trimmed output
                         + b.size * 4
                         + w1.size * w1.dtype.itemsize
                         + w.size * w.dtype.itemsize)

    kernel = functools.partial(_value_net_kernel, out_dim=out_dim)

    out = pl.pallas_call(
        kernel,
        out_shape=jax.ShapeDtypeStruct((B_pad, out_dim), jnp.float32),
        grid=(num_tiles,),
        in_specs=[
            pl.BlockSpec((TB, S_pad), lambda i: (i, 0)),      # state tile (pipelined)
            pl.BlockSpec((S_pad, P), lambda i: (0, 0)),       # w1, VMEM-resident
            pl.BlockSpec((3, P, P), lambda i: (0, 0, 0)),     # w2..w4, VMEM-resident
            pl.BlockSpec((4, 1, P), lambda i: (0, 0, 0)),     # biases, VMEM-resident
        ],
        out_specs=pl.BlockSpec((TB, out_dim), lambda i: (i, 0)),  # real cols only
        compiler_params=pltpu.CompilerParams(
            dimension_semantics=("parallel",),                # shard tiles across TCs
            vmem_limit_bytes=32 * 1024 * 1024,
        ),
        cost_estimate=pl.CostEstimate(
            flops=flops, transcendentals=0, bytes_accessed=bytes_accessed),
    )(x, w1, w, b)

    return out[:B]


if __name__ == "__main__":
    key = jax.random.PRNGKey(0)
    k_params, k_state, k_state2 = jax.random.split(key, 3)

    batch = 2
    state_dim = 4      # small continuous-control observation vector
    hidden_dim = 32
    output_dim = 1

    params = init_params(k_params, state_dim, hidden_dim, output_dim)

    def ref(x, p):
        h = jnp.maximum(x @ p["w1"] + p["b1"], 0.0)
        h = jnp.maximum(h @ p["w2"] + p["b2"], 0.0)
        h = jnp.maximum(h @ p["w3"] + p["b3"], 0.0)
        return h @ p["w4"] + p["b4"]

    # --- Exact (f32 MXU operands) path: bit-faithful to the PyTorch module ---
    packed_f32 = pack_params(params, mxu_dtype=jnp.float32)

    state = jax.random.normal(k_state, (batch, state_dim), jnp.float32)
    out = jax.block_until_ready(value_network_forward(state, packed_f32))
    assert out.shape == (batch, output_dim)
    assert out.dtype == jnp.float32
    assert jnp.allclose(out, ref(state, params), atol=1e-4, rtol=1e-4)

    # Larger batch: exercises multi-tile grid + row padding + tile rebalancing.
    big_state = jax.random.normal(k_state2, (200, state_dim), jnp.float32)
    big_out = jax.block_until_ready(
        value_network_forward(big_state, packed_f32, block_batch=64))
    assert big_out.shape == (200, output_dim)
    assert jnp.allclose(big_out, ref(big_state, params), atol=1e-4, rtol=1e-4)

    # --- Default fast path: bf16 MXU operands, f32 accumulation / bias / ReLU ---
    packed_bf16 = pack_params(params)   # mxu_dtype defaults to bfloat16
    fast_out = jax.block_until_ready(value_network_forward(big_state, packed_bf16))
    assert fast_out.shape == (200, output_dim)
    assert jnp.allclose(fast_out, ref(big_state, params), atol=5e-2, rtol=5e-2)

    print("KERNEL_OK")
</pallas_src>

<mosaic_0001>
module attributes {stable_mosaic.version = 11 : i64} {
  func.func @_value_net_kernel(%arg0: i32, %arg1: memref<8x8xf32, #tpu.memory_space<vmem>>, %arg2: memref<8x128xf32, #tpu.memory_space<vmem>>, %arg3: memref<3x128x128xf32, #tpu.memory_space<vmem>>, %arg4: memref<4x1x128xf32, #tpu.memory_space<vmem>>, %arg5: memref<8x1xf32, #tpu.memory_space<vmem>>) attributes {dimension_semantics = [#tpu.dimension_semantics<parallel>], iteration_bounds = array<i64: 1>, scalar_prefetch = 0 : i64, scratch_operands = 0 : i64, tpu.core_type = #tpu.core_type<tc>, window_params = [{transform_indices = @transform_0, window_bounds = array<i64: 8, 8>}, {pipeline_mode = #tpu.pipeline_mode<synchronous>, transform_indices = @transform_1, window_bounds = array<i64: 8, 128>}, {pipeline_mode = #tpu.pipeline_mode<synchronous>, transform_indices = @transform_2, window_bounds = array<i64: 3, 128, 128>}, {pipeline_mode = #tpu.pipeline_mode<synchronous>, transform_indices = @transform_3, window_bounds = array<i64: 4, 1, 128>}, {transform_indices = @transform_4, window_bounds = array<i64: 8, 1>}]} {
    %c0 = arith.constant 0 : index
    %c0_0 = arith.constant 0 : index
    %0 = vector.load %arg1[%c0, %c0_0] : memref<8x8xf32, #tpu.memory_space<vmem>>, vector<8x8xf32>
    %c0_1 = arith.constant 0 : index
    %c0_2 = arith.constant 0 : index
    %1 = vector.load %arg2[%c0_1, %c0_2] : memref<8x128xf32, #tpu.memory_space<vmem>>, vector<8x128xf32>
    %cst = arith.constant dense<0.000000e+00> : vector<8x128xf32>
    %2 = tpu.matmul %0, %1, %cst {dimension_numbers = #tpu.dot_dimension_numbers<[1], [0], [0], [1], [0, 0, 1, 1], [], []>} : vector<8x8xf32>, vector<8x128xf32>, vector<8x128xf32> -> vector<8x128xf32>
    %c0_3 = arith.constant 0 : index
    %c0_4 = arith.constant 0 : index
    %c0_5 = arith.constant 0 : index
    %3 = vector.load %arg4[%c0_3, %c0_4, %c0_5] : memref<4x1x128xf32, #tpu.memory_space<vmem>>, vector<1x1x128xf32>
    %4 = vector.shape_cast %3 : vector<1x1x128xf32> to vector<1x128xf32>
    %5 = vector.broadcast %4 : vector<1x128xf32> to vector<8x128xf32>
    %6 = arith.addf %2, %5 : vector<8x128xf32>
    %cst_6 = arith.constant 0.000000e+00 : f32
    %7 = vector.broadcast %cst_6 : f32 to vector<8x128xf32>
    %8 = arith.maximumf %6, %7 : vector<8x128xf32>
    %c0_7 = arith.constant 0 : index
    %c0_8 = arith.constant 0 : index
    %c0_9 = arith.constant 0 : index
    %9 = vector.load %arg3[%c0_7, %c0_8, %c0_9] : memref<3x128x128xf32, #tpu.memory_space<vmem>>, vector<1x128x128xf32>
    %10 = vector.shape_cast %9 : vector<1x128x128xf32> to vector<128x128xf32>
    %cst_10 = arith.constant dense<0.000000e+00> : vector<8x128xf32>
    %11 = tpu.matmul %8, %10, %cst_10 {dimension_numbers = #tpu.dot_dimension_numbers<[1], [0], [0], [1], [0, 0, 1, 1], [], []>} : vector<8x128xf32>, vector<128x128xf32>, vector<8x128xf32> -> vector<8x128xf32>
    %c1 = arith.constant 1 : index
    %c0_11 = arith.constant 0 : index
    %c0_12 = arith.constant 0 : index
    %12 = vector.load %arg4[%c1, %c0_11, %c0_12] : memref<4x1x128xf32, #tpu.memory_space<vmem>>, vector<1x1x128xf32>
    %13 = vector.shape_cast %12 : vector<1x1x128xf32> to vector<1x128xf32>
    %14 = vector.broadcast %13 : vector<1x128xf32> to vector<8x128xf32>
    %15 = arith.addf %11, %14 : vector<8x128xf32>
    %cst_13 = arith.constant 0.000000e+00 : f32
    %16 = vector.broadcast %cst_13 : f32 to vector<8x128xf32>
    %17 = arith.maximumf %15, %16 : vector<8x128xf32>
    %c1_14 = arith.constant 1 : index
    %c0_15 = arith.constant 0 : index
    %c0_16 = arith.constant 0 : index
    %18 = vector.load %arg3[%c1_14, %c0_15, %c0_16] : memref<3x128x128xf32, #tpu.memory_space<vmem>>, vector<1x128x128xf32>
    %19 = vector.shape_cast %18 : vector<1x128x128xf32> to vector<128x128xf32>
    %cst_17 = arith.constant dense<0.000000e+00> : vector<8x128xf32>
    %20 = tpu.matmul %17, %19, %cst_17 {dimension_numbers = #tpu.dot_dimension_numbers<[1], [0], [0], [1], [0, 0, 1, 1], [], []>} : vector<8x128xf32>, vector<128x128xf32>, vector<8x128xf32> -> vector<8x128xf32>
    %c2 = arith.constant 2 : index
    %c0_18 = arith.constant 0 : index
    %c0_19 = arith.constant 0 : index
    %21 = vector.load %arg4[%c2, %c0_18, %c0_19] : memref<4x1x128xf32, #tpu.memory_space<vmem>>, vector<1x1x128xf32>
    %22 = vector.shape_cast %21 : vector<1x1x128xf32> to vector<1x128xf32>
    %23 = vector.broadcast %22 : vector<1x128xf32> to vector<8x128xf32>
    %24 = arith.addf %20, %23 : vector<8x128xf32>
    %cst_20 = arith.constant 0.000000e+00 : f32
    %25 = vector.broadcast %cst_20 : f32 to vector<8x128xf32>
    %26 = arith.maximumf %24, %25 : vector<8x128xf32>
    %c2_21 = arith.constant 2 : index
    %c0_22 = arith.constant 0 : index
    %c0_23 = arith.constant 0 : index
    %27 = vector.load %arg3[%c2_21, %c0_22, %c0_23] : memref<3x128x128xf32, #tpu.memory_space<vmem>>, vector<1x128x128xf32>
    %28 = vector.shape_cast %27 : vector<1x128x128xf32> to vector<128x128xf32>
    %cst_24 = arith.constant dense<0.000000e+00> : vector<8x128xf32>
    %29 = tpu.matmul %26, %28, %cst_24 {dimension_numbers = #tpu.dot_dimension_numbers<[1], [0], [0], [1], [0, 0, 1, 1], [], []>} : vector<8x128xf32>, vector<128x128xf32>, vector<8x128xf32> -> vector<8x128xf32>
    %c3 = arith.constant 3 : index
    %c0_25 = arith.constant 0 : index
    %c0_26 = arith.constant 0 : index
    %30 = vector.load %arg4[%c3, %c0_25, %c0_26] : memref<4x1x128xf32, #tpu.memory_space<vmem>>, vector<1x1x128xf32>
    %31 = vector.shape_cast %30 : vector<1x1x128xf32> to vector<1x128xf32>
    %32 = vector.broadcast %31 : vector<1x128xf32> to vector<8x128xf32>
    %33 = arith.addf %29, %32 : vector<8x128xf32>
    %34 = vector.extract_strided_slice %33 {offsets = [0, 0], sizes = [8, 1], strides = [1, 1]} : vector<8x128xf32> to vector<8x1xf32>
    %c0_27 = arith.constant 0 : index
    %c0_28 = arith.constant 0 : index
    %35 = vector.load %arg5[%c0_27, %c0_28] : memref<8x1xf32, #tpu.memory_space<vmem>>, vector<8x1xf32>
    tpu.vector_store %arg5[%c0_27, %c0_28], %34 {strides = array<i32>} : memref<8x1xf32, #tpu.memory_space<vmem>>, vector<8x1xf32>,
    return
  }
  func.func @transform_0(%arg0: i32) -> (i32, i32) {
    %c0_i32 = arith.constant 0 : i32
    %c0_i32_0 = arith.constant 0 : i32
    return %arg0, %c0_i32 : i32, i32
  }
  func.func @transform_1(%arg0: i32) -> (i32, i32) {
    %c0_i32 = arith.constant 0 : i32
    %c0_i32_0 = arith.constant 0 : i32
    %c0_i32_1 = arith.constant 0 : i32
    return %c0_i32, %c0_i32_0 : i32, i32
  }
  func.func @transform_2(%arg0: i32) -> (i32, i32, i32) {
    %c0_i32 = arith.constant 0 : i32
    %c0_i32_0 = arith.constant 0 : i32
    %c0_i32_1 = arith.constant 0 : i32
    %c0_i32_2 = arith.constant 0 : i32
    return %c0_i32, %c0_i32_0, %c0_i32_1 : i32, i32, i32
  }
  func.func @transform_3(%arg0: i32) -> (i32, i32, i32) {
    %c0_i32 = arith.constant 0 : i32
    %c0_i32_0 = arith.constant 0 : i32
    %c0_i32_1 = arith.constant 0 : i32
    %c0_i32_2 = arith.constant 0 : i32
    return %c0_i32, %c0_i32_0, %c0_i32_1 : i32, i32, i32
  }
  func.func @transform_4(%arg0: i32) -> (i32, i32) {
    %c0_i32 = arith.constant 0 : i32
    %c0_i32_0 = arith.constant 0 : i32
    return %arg0, %c0_i32 : i32, i32
  }
}

</mosaic_0001>

<llo_original>
// kernel: tpu_custom_call.1
$region0: #{tpu_custom_call.1}
  #allocation0 [shape = 'u32[]', space=smem, size = 0x4, offset = 0x4, fixed_abs, tag = 'smem constant byte address 0x4 - core index']
  #allocation1 [shape = 'u32[144,128]{1,0:T(1,128)}', space=vmem, size = 0x12000, scoped, tag = 'internal scratch']
  %s0 = inlined_call_operand.hbm [shape: f32[8,8], index: 0, kind: input, shape index: {}]
  %s1 = inlined_call_operand.hbm [shape: f32[8,128], index: 1, kind: input, shape index: {}]
  %s2 = inlined_call_operand.hbm [shape: f32[3,128,128], index: 2, kind: input, shape index: {}]
  %s3 = inlined_call_operand.vmem [shape: f32[4,1,128], index: 3, kind: input, shape index: {}]
  %s4 = inlined_call_operand.vmem [shape: f32[8,1], index: 4, kind: output, shape index: {}]
  %s5 = sld [smem:[#allocation0]]
  $region38: #{tpu_custom_call.1} parent=0
    _
  %s7 = ssub.s32 1, %s5
  %s8 = scalar_select 0, %s7, %s5
  $region1: #{tpu_custom_call.1} parent=0
    #allocation2 [shape = 'u8[4096]{0}', space=vmem, size = 0x1000, scoped, tag = 'input window, operand 0, single buffered']
    #allocation3 [shape = 's32[1]{0}', space=sflag, size = 0x4, scoped, tag = 'scoped memory for tpu_custom_call.1']
    #allocation4 [shape = 'u8[4096]{0}', space=vmem, size = 0x1000, scoped, tag = 'input window, operand 1, single buffered']
    #allocation5 [shape = 's32[1]{0}', space=sflag, size = 0x4, scoped, tag = 'scoped memory for tpu_custom_call.1']
    #allocation6 [shape = 'u8[196608]{0}', space=vmem, size = 0x30000, scoped, tag = 'input window, operand 2, single buffered']
    %9 = vsyncpa [#allocation3], 0
    %10 = vsyncpa [#allocation5], 0
    // Predicated region
    $region2: #{tpu_custom_call.1} parent=1 // pred_check
      _
    $region3: #{tpu_custom_call.1} parent=1 // pred_check_branch
      %12 = sbr.rel (0) target = $region5
    $region4: #{tpu_custom_call.1} parent=1 // pred_region
      %s14 = ssub.s32 128, 128
      %15 = vsyncadd [#allocation3], %s14
      %s17 = sshll.u32 [#allocation2], 4
      %s18 = int_to_ptr.vmem [resolvable:$true] %s17
      %20 = dma.hbm_to_vmem [thread:$0]  %s0, 128, %s18, [#allocation3]
    $region5: #{tpu_custom_call.1} parent=1 // pred_fallthru
      _
    // Predicated region
    $region6: #{tpu_custom_call.1} parent=1 // pred_check
      _
    $region7: #{tpu_custom_call.1} parent=1 // pred_check_branch
      %22 = sbr.rel (0) target = $region9
    $region8: #{tpu_custom_call.1} parent=1 // pred_region
      %s24 = ssub.s32 128, 128
      %25 = vsyncadd [#allocation5], %s24
      %s27 = sshll.u32 [#allocation4], 4
      %s28 = int_to_ptr.vmem [resolvable:$true] %s27
      %30 = dma.hbm_to_vmem [thread:$0]  %s1, 128, %s28, [#allocation5]
    $region9: #{tpu_custom_call.1} parent=1 // pred_fallthru
      _
    // Predicated region
    $region10: #{tpu_custom_call.1} parent=1 // pred_check
      _
    $region11: #{tpu_custom_call.1} parent=1 // pred_check_branch
      %32 = sbr.rel (0) target = $region13
    $region12: #{tpu_custom_call.1} parent=1 // pred_region
      %s34 = ssub.s32 6144, 6144
      %35 = vsyncadd [#allocation5], %s34
      %s36 = sshll.u32 [#allocation6], 4
      %s37 = int_to_ptr.vmem [resolvable:$true] %s36
      %42 = dma.hbm_to_vmem [thread:$0]  %s2, 6144, %s37, [#allocation5], 128, 128, 8
    $region13: #{tpu_custom_call.1} parent=1 // pred_fallthru
      _
    // Predicated region
    $region14: #{tpu_custom_call.1} parent=1 // pred_check
      _
    $region15: #{tpu_custom_call.1} parent=1 // pred_check_branch
      %44 = sbr.rel (0) target = $region17
    $region16: #{tpu_custom_call.1} parent=1 // pred_region
      _
    $region17: #{tpu_custom_call.1} parent=1 // pred_fallthru
      _
    // Predicated region
    $region18: #{tpu_custom_call.1} parent=1 // pred_check
      _
    $region19: #{tpu_custom_call.1} parent=1 // pred_check_branch
      %46 = sbr.rel (0) target = $region21
    $region20: #{tpu_custom_call.1} parent=1 // pred_region
      %47 = dma.done [#allocation3], 128
    $region21: #{tpu_custom_call.1} parent=1 // pred_fallthru
      _
    // Predicated region
    $region22: #{tpu_custom_call.1} parent=1 // pred_check
      _
    $region23: #{tpu_custom_call.1} parent=1 // pred_check_branch
      %49 = sbr.rel (0) target = $region25
    $region24: #{tpu_custom_call.1} parent=1 // pred_region
      %50 = dma.done [#allocation5], 128
    $region25: #{tpu_custom_call.1} parent=1 // pred_fallthru
      _
    // Predicated region
    $region26: #{tpu_custom_call.1} parent=1 // pred_check
      _
    $region27: #{tpu_custom_call.1} parent=1 // pred_check_branch
      %52 = sbr.rel (0) target = $region29
    $region28: #{tpu_custom_call.1} parent=1 // pred_region
      %53 = dma.done [#allocation5], 6144
    $region29: #{tpu_custom_call.1} parent=1 // pred_fallthru
      _
    %v54 = vld [vmem:[#allocation2] sm:$0xff]
    %v55 = vld [vmem:[#allocation4] sm:$0xff]
    %v56 = vld [vmem:[%s3] sm:$0x1]
    %v58 = vlaneseq
    %v59 = vshrl.u32 %v58, 7
    %v60 = vsub.s32 0, %v59
    %v61 = vrot.slane %v56, %v60
    %vm63 = vcmask 64512
    %v65 = vsel %vm63, %v54, 0
    %67 = vmatprep.subr.mxu0 0.0
    %68 = vmatpush1.msra.mxu0 0.0
    %69 = vmatprep.subr.mxu0 0.0
    %70 = vmatpush1.msra.mxu0 0.0
    %71 = vmatprep.subr.mxu0 0.0
    %72 = vmatpush1.msra.mxu0 0.0
    %73 = vmatprep.subr.mxu0 0.0
    %74 = vmatpush1.msra.mxu0 0.0
    %75 = vmatprep.subr.mxu0 0.0
    %76 = vmatpush1.msra.mxu0 0.0
    %77 = vmatprep.subr.mxu0 0.0
    %78 = vmatpush1.msra.mxu0 0.0
    %79 = vmatprep.subr.mxu0 0.0
    %80 = vmatpush1.msra.mxu0 0.0
    %81 = vmatprep.subr.mxu0 0.0
    %82 = vmatpush1.msra.mxu0 0.0
    %83 = vmatprep.subr.mxu0 0.0
    %84 = vmatpush1.msra.mxu0 0.0
    %85 = vmatprep.subr.mxu0 0.0
    %86 = vmatpush1.msra.mxu0 0.0
    %87 = vmatprep.subr.mxu0 0.0
    %88 = vmatpush1.msra.mxu0 0.0
    %89 = vmatprep.subr.mxu0 0.0
    %90 = vmatpush1.msra.mxu0 0.0
    %91 = vmatprep.subr.mxu0 0.0
    %92 = vmatpush1.msra.mxu0 0.0
    %93 = vmatprep.subr.mxu0 0.0
    %94 = vmatpush1.msra.mxu0 0.0
    %95 = vmatprep.subr.mxu0 0.0
    %96 = vmatpush1.msra.mxu0 0.0
    %97 = vmatprep.subr.mxu0 0.0
    %98 = vmatpush1.msra.mxu0 %v55
    %99 = vmatprep.subr.mxu0 0.0
    %100 = vmatpush2.msra.mxu0 0.0
    %101 = vmatprep.subr.mxu0 0.0
    %102 = vmatpush2.msra.mxu0 0.0
    %103 = vmatprep.subr.mxu0 0.0
    %104 = vmatpush2.msra.mxu0 0.0
    %105 = vmatprep.subr.mxu0 0.0
    %106 = vmatpush2.msra.mxu0 0.0
    %107 = vmatprep.subr.mxu0 0.0
    %108 = vmatpush2.msra.mxu0 0.0
    %109 = vmatprep.subr.mxu0 0.0
    %110 = vmatpush2.msra.mxu0 0.0
    %111 = vmatprep.subr.mxu0 0.0
    %112 = vmatpush2.msra.mxu0 0.0
    %113 = vmatprep.subr.mxu0 0.0
    %114 = vmatpush2.msra.mxu0 0.0
    %115 = vmatprep.subr.mxu0 0.0
    %116 = vmatpush2.msra.mxu0 0.0
    %117 = vmatprep.subr.mxu0 0.0
    %118 = vmatpush2.msra.mxu0 0.0
    %119 = vmatprep.subr.mxu0 0.0
    %120 = vmatpush2.msra.mxu0 0.0
    %121 = vmatprep.subr.mxu0 0.0
    %122 = vmatpush2.msra.mxu0 0.0
    %123 = vmatprep.subr.mxu0 0.0
    %124 = vmatpush2.msra.mxu0 0.0
    %125 = vmatprep.subr.mxu0 0.0
    %126 = vmatpush2.msra.mxu0 0.0
    %127 = vmatprep.subr.mxu0 0.0
    %128 = vmatpush2.msra.mxu0 0.0
    %129 = vmatprep.subr.mxu0 0.0
    %130 = vmatpush2.msra.mxu0 0.0
    %131 = vmatprep.mubr.f32.mxu0 0.0
    %132 = vmatmul.mubr.f32.gmra.mxu0 %v65
    %v133 = vpop.f32.mrf.mxu0
    %v134 = vadd.f32 %v61, %v133
    %v135 = vpop.f32.mrf.mxu0
    %136 = vdwg.mxu0
    %v137 = vmax.f32 %v134, 0.0
    %v138 = vld [vmem:[#allocation6] sm:$0xff]
    %v139 = vld [vmem:[#allocation6 + $0x8] sm:$0xff]
    %v140 = vld [vmem:[#allocation6 + $0x10] sm:$0xff]
    %v141 = vld [vmem:[#allocation6 + $0x18] sm:$0xff]
    %v142 = vld [vmem:[#allocation6 + $0x20] sm:$0xff]
    %v143 = vld [vmem:[#allocation6 + $0x28] sm:$0xff]
    %v144 = vld [vmem:[#allocation6 + $0x30] sm:$0xff]
    %v145 = vld [vmem:[#allocation6 + $0x38] sm:$0xff]
    %v146 = vld [vmem:[#allocation6 + $0x40] sm:$0xff]
    %v147 = vld [vmem:[#allocation6 + $0x48] sm:$0xff]
    %v148 = vld [vmem:[#allocation6 + $0x50] sm:$0xff]
    %v149 = vld [vmem:[#allocation6 + $0x58] sm:$0xff]
    %v150 = vld [vmem:[#allocation6 + $0x60] sm:$0xff]
    %v151 = vld [vmem:[#allocation6 + $0x68] sm:$0xff]
    %v152 = vld [vmem:[#allocation6 + $0x70] sm:$0xff]
    %v153 = vld [vmem:[#allocation6 + $0x78] sm:$0xff]
    %s154 = scalar_lea.vmem %s3, 1
    %v155 = vld [vmem:[%s154] sm:$0x1]
    %v157 = vlaneseq
    %v158 = vshrl.u32 %v157, 7
    %v159 = vsub.s32 0, %v158
    %v160 = vrot.slane %v155, %v159
    %162 = vmatprep.subr.mxu0 0.0
    %163 = vmatpush1.msra.mxu0 %v153
    %164 = vmatprep.subr.mxu0 0.0
    %165 = vmatpush1.msra.mxu0 %v152
    %166 = vmatprep.subr.mxu0 0.0
    %167 = vmatpush1.msra.mxu0 %v151
    %168 = vmatprep.subr.mxu0 0.0
    %169 = vmatpush1.msra.mxu0 %v150
    %170 = vmatprep.subr.mxu0 0.0
    %171 = vmatpush1.msra.mxu0 %v149
    %172 = vmatprep.subr.mxu0 0.0
    %173 = vmatpush1.msra.mxu0 %v148
    %174 = vmatprep.subr.mxu0 0.0
    %175 = vmatpush1.msra.mxu0 %v147
    %176 = vmatprep.subr.mxu0 0.0
    %177 = vmatpush1.msra.mxu0 %v146
    %178 = vmatprep.subr.mxu0 0.0
    %179 = vmatpush1.msra.mxu0 %v145
    %180 = vmatprep.subr.mxu0 0.0
    %181 = vmatpush1.msra.mxu0 %v144
    %182 = vmatprep.subr.mxu0 0.0
    %183 = vmatpush1.msra.mxu0 %v143
    %184 = vmatprep.subr.mxu0 0.0
    %185 = vmatpush1.msra.mxu0 %v142
    %186 = vmatprep.subr.mxu0 0.0
    %187 = vmatpush1.msra.mxu0 %v141
    %188 = vmatprep.subr.mxu0 0.0
    %189 = vmatpush1.msra.mxu0 %v140
    %190 = vmatprep.subr.mxu0 0.0
    %191 = vmatpush1.msra.mxu0 %v139
    %192 = vmatprep.subr.mxu0 0.0
    %193 = vmatpush1.msra.mxu0 %v138
    %194 = vmatprep.subr.mxu0 0.0
    %195 = vmatpush2.msra.mxu0 0.0
    %196 = vmatprep.subr.mxu0 0.0
    %197 = vmatpush2.msra.mxu0 0.0
    %198 = vmatprep.subr.mxu0 0.0
    %199 = vmatpush2.msra.mxu0 0.0
    %200 = vmatprep.subr.mxu0 0.0
    %201 = vmatpush2.msra.mxu0 0.0
    %202 = vmatprep.subr.mxu0 0.0
    %203 = vmatpush2.msra.mxu0 0.0
    %204 = vmatprep.subr.mxu0 0.0
    %205 = vmatpush2.msra.mxu0 0.0
    %206 = vmatprep.subr.mxu0 0.0
    %207 = vmatpush2.msra.mxu0 0.0
    %208 = vmatprep.subr.mxu0 0.0
    %209 = vmatpush2.msra.mxu0 0.0
    %210 = vmatprep.subr.mxu0 0.0
    %211 = vmatpush2.msra.mxu0 0.0
    %212 = vmatprep.subr.mxu0 0.0
    %213 = vmatpush2.msra.mxu0 0.0
    %214 = vmatprep.subr.mxu0 0.0
    %215 = vmatpush2.msra.mxu0 0.0
    %216 = vmatprep.subr.mxu0 0.0
    %217 = vmatpush2.msra.mxu0 0.0
    %218 = vmatprep.subr.mxu0 0.0
    %219 = vmatpush2.msra.mxu0 0.0
    %220 = vmatprep.subr.mxu0 0.0
    %221 = vmatpush2.msra.mxu0 0.0
    %222 = vmatprep.subr.mxu0 0.0
    %223 = vmatpush2.msra.mxu0 0.0
    %224 = vmatprep.subr.mxu0 0.0
    %225 = vmatpush2.msra.mxu0 0.0
    %226 = vmatprep.mubr.f32.mxu0 0.0
    %227 = vmatmul.mubr.f32.gmra.mxu0 %v137
    %v228 = vpop.f32.mrf.mxu0
    %v229 = vadd.f32 %v160, %v228
    %v230 = vpop.f32.mrf.mxu0
    %231 = vdwg.mxu0
    %v232 = vmax.f32 %v229, 0.0
    %s233 = scalar_lea.vmem [#allocation6], 128
    %v234 = vld [vmem:[%s233] sm:$0xff]
    %v235 = vld [vmem:[%s233 + $0x8] sm:$0xff]
    %v236 = vld [vmem:[%s233 + $0x10] sm:$0xff]
    %v237 = vld [vmem:[%s233 + $0x18] sm:$0xff]
    %v238 = vld [vmem:[%s233 + $0x20] sm:$0xff]
    %v239 = vld [vmem:[%s233 + $0x28] sm:$0xff]
    %v240 = vld [vmem:[%s233 + $0x30] sm:$0xff]
    %v241 = vld [vmem:[%s233 + $0x38] sm:$0xff]
    %v242 = vld [vmem:[%s233 + $0x40] sm:$0xff]
    %v243 = vld [vmem:[%s233 + $0x48] sm:$0xff]
    %v244 = vld [vmem:[%s233 + $0x50] sm:$0xff]
    %v245 = vld [vmem:[%s233 + $0x58] sm:$0xff]
    %v246 = vld [vmem:[%s233 + $0x60] sm:$0xff]
    %v247 = vld [vmem:[%s233 + $0x68] sm:$0xff]
    %v248 = vld [vmem:[%s233 + $0x70] sm:$0xff]
    %v249 = vld [vmem:[%s233 + $0x78] sm:$0xff]
    %s250 = scalar_lea.vmem %s3, 2
    %v251 = vld [vmem:[%s250] sm:$0x1]
    %v253 = vlaneseq
    %v254 = vshrl.u32 %v253, 7
    %v255 = vsub.s32 0, %v254
    %v256 = vrot.slane %v251, %v255
    %258 = vmatprep.subr.mxu0 0.0
    %259 = vmatpush1.msra.mxu0 %v249
    %260 = vmatprep.subr.mxu0 0.0
    %261 = vmatpush1.msra.mxu0 %v248
    %262 = vmatprep.subr.mxu0 0.0
    %263 = vmatpush1.msra.mxu0 %v247
    %264 = vmatprep.subr.mxu0 0.0
    %265 = vmatpush1.msra.mxu0 %v246
    %266 = vmatprep.subr.mxu0 0.0
    %267 = vmatpush1.msra.mxu0 %v245
    %268 = vmatprep.subr.mxu0 0.0
    %269 = vmatpush1.msra.mxu0 %v244
    %270 = vmatprep.subr.mxu0 0.0
    %271 = vmatpush1.msra.mxu0 %v243
    %272 = vmatprep.subr.mxu0 0.0
    %273 = vmatpush1.msra.mxu0 %v242
    %274 = vmatprep.subr.mxu0 0.0
    %275 = vmatpush1.msra.mxu0 %v241
    %276 = vmatprep.subr.mxu0 0.0
    %277 = vmatpush1.msra.mxu0 %v240
    %278 = vmatprep.subr.mxu0 0.0
    %279 = vmatpush1.msra.mxu0 %v239
    %280 = vmatprep.subr.mxu0 0.0
    %281 = vmatpush1.msra.mxu0 %v238
    %282 = vmatprep.subr.mxu0 0.0
    %283 = vmatpush1.msra.mxu0 %v237
    %284 = vmatprep.subr.mxu0 0.0
    %285 = vmatpush1.msra.mxu0 %v236
    %286 = vmatprep.subr.mxu0 0.0
    %287 = vmatpush1.msra.mxu0 %v235
    %288 = vmatprep.subr.mxu0 0.0
    %289 = vmatpush1.msra.mxu0 %v234
    %290 = vmatprep.subr.mxu0 0.0
    %291 = vmatpush2.msra.mxu0 0.0
    %292 = vmatprep.subr.mxu0 0.0
    %293 = vmatpush2.msra.mxu0 0.0
    %294 = vmatprep.subr.mxu0 0.0
    %295 = vmatpush2.msra.mxu0 0.0
    %296 = vmatprep.subr.mxu0 0.0
    %297 = vmatpush2.msra.mxu0 0.0
    %298 = vmatprep.subr.mxu0 0.0
    %299 = vmatpush2.msra.mxu0 0.0
    %300 = vmatprep.subr.mxu0 0.0
    %301 = vmatpush2.msra.mxu0 0.0
    %302 = vmatprep.subr.mxu0 0.0
    %303 = vmatpush2.msra.mxu0 0.0
    %304 = vmatprep.subr.mxu0 0.0
    %305 = vmatpush2.msra.mxu0 0.0
    %306 = vmatprep.subr.mxu0 0.0
    %307 = vmatpush2.msra.mxu0 0.0
    %308 = vmatprep.subr.mxu0 0.0
    %309 = vmatpush2.msra.mxu0 0.0
    %310 = vmatprep.subr.mxu0 0.0
    %311 = vmatpush2.msra.mxu0 0.0
    %312 = vmatprep.subr.mxu0 0.0
    %313 = vmatpush2.msra.mxu0 0.0
    %314 = vmatprep.subr.mxu0 0.0
    %315 = vmatpush2.msra.mxu0 0.0
    %316 = vmatprep.subr.mxu0 0.0
    %317 = vmatpush2.msra.mxu0 0.0
    %318 = vmatprep.subr.mxu0 0.0
    %319 = vmatpush2.msra.mxu0 0.0
    %320 = vmatprep.subr.mxu0 0.0
    %321 = vmatpush2.msra.mxu0 0.0
    %322 = vmatprep.mubr.f32.mxu0 0.0
    %323 = vmatmul.mubr.f32.gmra.mxu0 %v232
    %v324 = vpop.f32.mrf.mxu0
    %v325 = vadd.f32 %v256, %v324
    %v326 = vpop.f32.mrf.mxu0
    %327 = vdwg.mxu0
    %v328 = vmax.f32 %v325, 0.0
    %s329 = scalar_lea.vmem [#allocation6], 256
    %v330 = vld [vmem:[%s329] sm:$0xff]
    %v331 = vld [vmem:[%s329 + $0x8] sm:$0xff]
    %v332 = vld [vmem:[%s329 + $0x10] sm:$0xff]
    %v333 = vld [vmem:[%s329 + $0x18] sm:$0xff]
    %v334 = vld [vmem:[%s329 + $0x20] sm:$0xff]
    %v335 = vld [vmem:[%s329 + $0x28] sm:$0xff]
    %v336 = vld [vmem:[%s329 + $0x30] sm:$0xff]
    %v337 = vld [vmem:[%s329 + $0x38] sm:$0xff]
    %v338 = vld [vmem:[%s329 + $0x40] sm:$0xff]
    %v339 = vld [vmem:[%s329 + $0x48] sm:$0xff]
    %v340 = vld [vmem:[%s329 + $0x50] sm:$0xff]
    %v341 = vld [vmem:[%s329 + $0x58] sm:$0xff]
    %v342 = vld [vmem:[%s329 + $0x60] sm:$0xff]
    %v343 = vld [vmem:[%s329 + $0x68] sm:$0xff]
    %v344 = vld [vmem:[%s329 + $0x70] sm:$0xff]
    %v345 = vld [vmem:[%s329 + $0x78] sm:$0xff]
    %s346 = scalar_lea.vmem %s3, 3
    %v347 = vld [vmem:[%s346] sm:$0x1]
    %v349 = vlaneseq
    %v350 = vshrl.u32 %v349, 7
    %v351 = vsub.s32 0, %v350
    %v352 = vrot.slane %v347, %v351
    %354 = vmatprep.subr.mxu0 0.0
    %355 = vmatpush1.msra.mxu0 %v345
    %356 = vmatprep.subr.mxu0 0.0
    %357 = vmatpush1.msra.mxu0 %v344
    %358 = vmatprep.subr.mxu0 0.0
    %359 = vmatpush1.msra.mxu0 %v343
    %360 = vmatprep.subr.mxu0 0.0
    %361 = vmatpush1.msra.mxu0 %v342
    %362 = vmatprep.subr.mxu0 0.0
    %363 = vmatpush1.msra.mxu0 %v341
    %364 = vmatprep.subr.mxu0 0.0
    %365 = vmatpush1.msra.mxu0 %v340
    %366 = vmatprep.subr.mxu0 0.0
    %367 = vmatpush1.msra.mxu0 %v339
    %368 = vmatprep.subr.mxu0 0.0
    %369 = vmatpush1.msra.mxu0 %v338
    %370 = vmatprep.subr.mxu0 0.0
    %371 = vmatpush1.msra.mxu0 %v337
    %372 = vmatprep.subr.mxu0 0.0
    %373 = vmatpush1.msra.mxu0 %v336
    %374 = vmatprep.subr.mxu0 0.0
    %375 = vmatpush1.msra.mxu0 %v335
    %376 = vmatprep.subr.mxu0 0.0
    %377 = vmatpush1.msra.mxu0 %v334
    %378 = vmatprep.subr.mxu0 0.0
    %379 = vmatpush1.msra.mxu0 %v333
    %380 = vmatprep.subr.mxu0 0.0
    %381 = vmatpush1.msra.mxu0 %v332
    %382 = vmatprep.subr.mxu0 0.0
    %383 = vmatpush1.msra.mxu0 %v331
    %384 = vmatprep.subr.mxu0 0.0
    %385 = vmatpush1.msra.mxu0 %v330
    %386 = vmatprep.subr.mxu0 0.0
    %387 = vmatpush2.msra.mxu0 0.0
    %388 = vmatprep.subr.mxu0 0.0
    %389 = vmatpush2.msra.mxu0 0.0
    %390 = vmatprep.subr.mxu0 0.0
    %391 = vmatpush2.msra.mxu0 0.0
    %392 = vmatprep.subr.mxu0 0.0
    %393 = vmatpush2.msra.mxu0 0.0
    %394 = vmatprep.subr.mxu0 0.0
    %395 = vmatpush2.msra.mxu0 0.0
    %396 = vmatprep.subr.mxu0 0.0
    %397 = vmatpush2.msra.mxu0 0.0
    %398 = vmatprep.subr.mxu0 0.0
    %399 = vmatpush2.msra.mxu0 0.0
    %400 = vmatprep.subr.mxu0 0.0
    %401 = vmatpush2.msra.mxu0 0.0
    %402 = vmatprep.subr.mxu0 0.0
    %403 = vmatpush2.msra.mxu0 0.0
    %404 = vmatprep.subr.mxu0 0.0
    %405 = vmatpush2.msra.mxu0 0.0
    %406 = vmatprep.subr.mxu0 0.0
    %407 = vmatpush2.msra.mxu0 0.0
    %408 = vmatprep.subr.mxu0 0.0
    %409 = vmatpush2.msra.mxu0 0.0
    %410 = vmatprep.subr.mxu0 0.0
    %411 = vmatpush2.msra.mxu0 0.0
    %412 = vmatprep.subr.mxu0 0.0
    %413 = vmatpush2.msra.mxu0 0.0
    %414 = vmatprep.subr.mxu0 0.0
    %415 = vmatpush2.msra.mxu0 0.0
    %416 = vmatprep.subr.mxu0 0.0
    %417 = vmatpush2.msra.mxu0 0.0
    %418 = vmatprep.mubr.f32.mxu0 0.0
    %419 = vmatmul.mubr.f32.gmra.mxu0 %v328
    %v420 = vpop.f32.mrf.mxu0
    %v421 = vadd.f32 %v352, %v420
    %v422 = vpop.f32.mrf.mxu0
    %423 = vdwg.mxu0
    %vm424 = vcmask 7168
    %425 = vst.msk [vmem:[%s4] sm:$0xff] %vm424, %v421
    // Predicated region
    $region30: #{tpu_custom_call.1} parent=1 // pred_check
      _
    $region31: #{tpu_custom_call.1} parent=1 // pred_check_branch
      %427 = sbr.rel (0) target = $region33
    $region32: #{tpu_custom_call.1} parent=1 // pred_region
      _
    $region33: #{tpu_custom_call.1} parent=1 // pred_fallthru
      _
    // Predicated region
    $region34: #{tpu_custom_call.1} parent=1 // pred_check
      _
    $region35: #{tpu_custom_call.1} parent=1 // pred_check_branch
      %429 = sbr.rel (0) target = $region37
    $region36: #{tpu_custom_call.1} parent=1 // pred_region
      _
    $region37: #{tpu_custom_call.1} parent=1 // pred_fallthru
      _
    %430 = vsyncpa [#allocation3], 1
    %431 = vsyncpa [#allocation5], 1

</llo_original>
